<compile_context>
chip_gen: v7x
topology: tpu7x:2x2x1
jax: 0.10.0
libtpu: 0.0.40
codegen_flags: <defaults>
</compile_context>

<pallas_src>
import jax
import jax.numpy as jnp
from jax.experimental import pallas as pl
from jax.experimental.pallas import tpu as pltpu

LANE = 128
DEFAULT_TILE_N = 512


def _round_up(v, m):
    return ((v + m - 1) // m) * m


def _kmlp_kernel(x_ref, w1_ref, b1_ref, w2_ref, b2_ref, o_ref):
    """One row-tile grid step; all weights VMEM-resident across the grid.

    x_ref  : [TILE_N, F]      f32  (cast to bf16 in-kernel, VPU)
    w1_ref : [F, K*H]         bf16 (concat of per-head first-layer weights)
    b1_ref : [1, K*H]         f32
    w2_ref : [K*H, Ctot]      bf16 (block-diagonal; Ctot = sum(nc) padded to 128)
    b2_ref : [1, Ctot]        f32
    o_ref  : [TILE_N, Ctot]   f32  (lane-dense store, all heads concatenated)
    """
    x = x_ref[...].astype(jnp.bfloat16)
    h = jnp.dot(x, w1_ref[...], preferred_element_type=jnp.float32)
    h = jnp.maximum(h + b1_ref[...], 0.0)          # bias + ReLU in f32 (VPU)
    out = jnp.dot(h.astype(jnp.bfloat16), w2_ref[...],
                  preferred_element_type=jnp.float32)
    o_ref[...] = (out + b2_ref[...]).astype(o_ref.dtype)


def _choose_row_tile(N, tile_n):
    """Row tile size: big (default 512) for large N; for small N split into
    >= 2 tiles so v7x's two TensorCores both get work. Always a multiple of 16
    (safe for f32 and bf16 sublane packing) unless the tile is the full dim."""
    if N <= 32:
        return N                      # single full-dim tile
    if N <= tile_n:
        return min(_round_up(pl.cdiv(N, 2), 16), _round_up(N, 16))
    return tile_n


def kmlp_fused(features, w1_cat, b1_cat, w2_blk, b2_cat, *, tile_n=DEFAULT_TILE_N):
    """All K heads in one pallas_call with a 1-D grid over row tiles."""
    N, F = features.shape
    KH = w1_cat.shape[1]
    Ctot = w2_blk.shape[1]

    tn = _choose_row_tile(N, tile_n)
    n_pad = _round_up(N, tn)
    x = features if n_pad == N else jnp.pad(features, ((0, n_pad - N), (0, 0)))

    # Explicit VMEM budget (double-buffered x/out tiles + resident weights).
    vmem_bytes = (
        2 * tn * F * x.dtype.itemsize      # x tiles (double-buffered)
        + F * KH * 2 + KH * Ctot * 2       # bf16 weights, resident
        + (KH + Ctot) * 4                  # f32 biases, resident
        + 2 * tn * Ctot * 4                # f32 output tiles (double-buffered)
    )
    vmem_limit = int(min(max(2 * vmem_bytes, 8 << 20), 64 << 20))

    grid = (n_pad // tn,)
    out = pl.pallas_call(
        _kmlp_kernel,
        out_shape=jax.ShapeDtypeStruct((n_pad, Ctot), jnp.float32),
        grid=grid,
        in_specs=[
            pl.BlockSpec((tn, F), lambda i: (i, 0)),
            # Constant index maps -> DMA'd once, VMEM-resident across the grid.
            pl.BlockSpec((F, KH), lambda i: (0, 0)),
            pl.BlockSpec((1, KH), lambda i: (0, 0)),
            pl.BlockSpec((KH, Ctot), lambda i: (0, 0)),
            pl.BlockSpec((1, Ctot), lambda i: (0, 0)),
        ],
        out_specs=pl.BlockSpec((tn, Ctot), lambda i: (i, 0)),
        compiler_params=pltpu.CompilerParams(
            dimension_semantics=("parallel",),   # row tiles are independent
            vmem_limit_bytes=vmem_limit,
        ),
    )(x, w1_cat, b1_cat, w2_blk, b2_cat)

    return out[:N, :]


class KMLPPallas:
    """Pallas port of KMLP: len(nclasses) independent MLP([nfeat, nhid, nc]) heads."""

    def __init__(self, nfeat, nhid, nclasses, key,
                 useDropout=False, keepProb=0.5, useBatchNorm=False):
        # TODO(synk): dropout / batchnorm branches of the reference MLP are not
        # implemented (defaults useDropout=False, useBatchNorm=False).
        self.nclasses = tuple(nclasses)
        self.nfeat, self.nhid = nfeat, nhid
        K = len(self.nclasses)

        params = []
        for nc in self.nclasses:
            key, k1, k2, k3, k4 = jax.random.split(key, 5)
            lim1 = 1.0 / (nfeat ** 0.5)   # PyTorch nn.Linear default init bounds
            lim2 = 1.0 / (nhid ** 0.5)
            w1 = jax.random.uniform(k1, (nfeat, nhid), jnp.float32, -lim1, lim1)
            b1 = jax.random.uniform(k2, (1, nhid), jnp.float32, -lim1, lim1)
            w2 = jax.random.uniform(k3, (nhid, nc), jnp.float32, -lim2, lim2)
            b2 = jax.random.uniform(k4, (1, nc), jnp.float32, -lim2, lim2)
            params.append((w1, b1, w2, b2))
        self.params = params  # kept in f32 for the pure-JAX reference

        # --- Fused weight layout (built once at init) ---------------------
        # First layer: heads concatenated along the hidden axis -> [F, K*H].
        self.w1_cat = jnp.concatenate([p[0] for p in params], axis=1).astype(jnp.bfloat16)
        self.b1_cat = jnp.concatenate([p[1] for p in params], axis=1)          # [1, K*H] f32

        # Second layer: block-diagonal [K*H, Ctot]; each head's real class
        # columns land contiguously in ONE concatenated class axis padded to 128.
        KH = K * nhid
        self.ctot = _round_up(sum(self.nclasses), LANE)
        self.col_off = []
        w2_blk = jnp.zeros((KH, self.ctot), jnp.float32)
        b2_cat = jnp.zeros((1, self.ctot), jnp.float32)
        off = 0
        for k, nc in enumerate(self.nclasses):
            w2_blk = w2_blk.at[k * nhid:(k + 1) * nhid, off:off + nc].set(params[k][2])
            b2_cat = b2_cat.at[:, off:off + nc].set(params[k][3])
            self.col_off.append(off)
            off += nc
        self.w2_blk = w2_blk.astype(jnp.bfloat16)
        self.b2_cat = b2_cat

    def __call__(self, features, adj=None):
        # adj is accepted but unused, exactly like the reference forward.
        out = kmlp_fused(features, self.w1_cat, self.b1_cat, self.w2_blk, self.b2_cat)
        return [out[:, off:off + nc]
                for off, nc in zip(self.col_off, self.nclasses)]


def _reference(features, params):
    """Pure-JAX reference matching the kernel's bf16-matmul / f32-accumulate path."""
    xb = features.astype(jnp.bfloat16)
    outs = []
    for (w1, b1, w2, b2) in params:
        h = jnp.dot(xb, w1.astype(jnp.bfloat16),
                    preferred_element_type=jnp.float32) + b1
        h = jnp.maximum(h, 0.0)
        o = jnp.dot(h.astype(jnp.bfloat16), w2.astype(jnp.bfloat16),
                    preferred_element_type=jnp.float32) + b2
        outs.append(o)
    return outs


if __name__ == "__main__":
    key = jax.random.PRNGKey(0)
    key, kx, kp = jax.random.split(key, 3)

    # Small shapes consistent with the module: N nodes x nfeat features,
    # two classification heads.
    N, nfeat, nhid = 256, 128, 128
    nclasses = [4, 8]

    features = jax.random.normal(kx, (N, nfeat), jnp.float32)
    adj = jnp.eye(N, dtype=jnp.float32)  # unused by the forward, kept for parity

    model = KMLPPallas(nfeat, nhid, nclasses, kp)

    outs = model(features, adj)
    outs = [jax.block_until_ready(o) for o in outs]

    refs = _reference(features, model.params)
    for o, r, nc in zip(outs, refs, nclasses):
        assert o.shape == (N, nc), (o.shape, (N, nc))
        err = float(jnp.max(jnp.abs(o - r)))
        assert jnp.allclose(o, r, atol=5e-3, rtol=5e-3), f"mismatch vs ref, max |err|={err}"

    print("KERNEL_OK")
</pallas_src>

<mosaic_0001>
module attributes {stable_mosaic.version = 11 : i64} {
  func.func @_kmlp_kernel(%arg0: i32, %arg1: memref<128x128xf32, #tpu.memory_space<vmem>>, %arg2: memref<128x256xbf16, #tpu.memory_space<vmem>>, %arg3: memref<1x256xf32, #tpu.memory_space<vmem>>, %arg4: memref<256x128xbf16, #tpu.memory_space<vmem>>, %arg5: memref<1x128xf32, #tpu.memory_space<vmem>>, %arg6: memref<128x128xf32, #tpu.memory_space<vmem>>) attributes {dimension_semantics = [#tpu.dimension_semantics<parallel>], iteration_bounds = array<i64: 2>, scalar_prefetch = 0 : i64, scratch_operands = 0 : i64, tpu.core_type = #tpu.core_type<tc>, window_params = [{transform_indices = @transform_0, window_bounds = array<i64: 128, 128>}, {pipeline_mode = #tpu.pipeline_mode<synchronous>, transform_indices = @transform_1, window_bounds = array<i64: 128, 256>}, {pipeline_mode = #tpu.pipeline_mode<synchronous>, transform_indices = @transform_2, window_bounds = array<i64: 1, 256>}, {pipeline_mode = #tpu.pipeline_mode<synchronous>, transform_indices = @transform_3, window_bounds = array<i64: 256, 128>}, {pipeline_mode = #tpu.pipeline_mode<synchronous>, transform_indices = @transform_4, window_bounds = array<i64: 1, 128>}, {transform_indices = @transform_5, window_bounds = array<i64: 128, 128>}]} {
    %c0 = arith.constant 0 : index
    %c0_0 = arith.constant 0 : index
    %0 = vector.load %arg1[%c0, %c0_0] : memref<128x128xf32, #tpu.memory_space<vmem>>, vector<128x128xf32>
    %1 = arith.truncf %0 : vector<128x128xf32> to vector<128x128xbf16>
    %c0_1 = arith.constant 0 : index
    %c0_2 = arith.constant 0 : index
    %2 = vector.load %arg2[%c0_1, %c0_2] : memref<128x256xbf16, #tpu.memory_space<vmem>>, vector<128x256xbf16>
    %cst = arith.constant dense<0.000000e+00> : vector<128x256xf32>
    %3 = tpu.matmul %1, %2, %cst {dimension_numbers = #tpu.dot_dimension_numbers<[1], [0], [0], [1], [0, 0, 1, 1], [], []>} : vector<128x128xbf16>, vector<128x256xbf16>, vector<128x256xf32> -> vector<128x256xf32>
    %c0_3 = arith.constant 0 : index
    %c0_4 = arith.constant 0 : index
    %4 = vector.load %arg3[%c0_3, %c0_4] : memref<1x256xf32, #tpu.memory_space<vmem>>, vector<1x256xf32>
    %5 = vector.broadcast %4 : vector<1x256xf32> to vector<128x256xf32>
    %6 = arith.addf %3, %5 : vector<128x256xf32>
    %cst_5 = arith.constant 0.000000e+00 : f32
    %7 = vector.broadcast %cst_5 : f32 to vector<128x256xf32>
    %8 = arith.maximumf %6, %7 : vector<128x256xf32>
    %9 = arith.truncf %8 : vector<128x256xf32> to vector<128x256xbf16>
    %c0_6 = arith.constant 0 : index
    %c0_7 = arith.constant 0 : index
    %10 = vector.load %arg4[%c0_6, %c0_7] : memref<256x128xbf16, #tpu.memory_space<vmem>>, vector<256x128xbf16>
    %cst_8 = arith.constant dense<0.000000e+00> : vector<128x128xf32>
    %11 = tpu.matmul %9, %10, %cst_8 {dimension_numbers = #tpu.dot_dimension_numbers<[1], [0], [0], [1], [0, 0, 1, 1], [], []>} : vector<128x256xbf16>, vector<256x128xbf16>, vector<128x128xf32> -> vector<128x128xf32>
    %c0_9 = arith.constant 0 : index
    %c0_10 = arith.constant 0 : index
    %12 = vector.load %arg5[%c0_9, %c0_10] : memref<1x128xf32, #tpu.memory_space<vmem>>, vector<1x128xf32>
    %13 = vector.broadcast %12 : vector<1x128xf32> to vector<128x128xf32>
    %14 = arith.addf %11, %13 : vector<128x128xf32>
    %c0_11 = arith.constant 0 : index
    %c0_12 = arith.constant 0 : index
    %15 = vector.load %arg6[%c0_11, %c0_12] : memref<128x128xf32, #tpu.memory_space<vmem>>, vector<128x128xf32>
    tpu.vector_store %arg6[%c0_11, %c0_12], %14 {strides = array<i32>} : memref<128x128xf32, #tpu.memory_space<vmem>>, vector<128x128xf32>,
    return
  }
  func.func @transform_0(%arg0: i32) -> (i32, i32) {
    %c0_i32 = arith.constant 0 : i32
    %c0_i32_0 = arith.constant 0 : i32
    return %arg0, %c0_i32 : i32, i32
  }
  func.func @transform_1(%arg0: i32) -> (i32, i32) {
    %c0_i32 = arith.constant 0 : i32
    %c0_i32_0 = arith.constant 0 : i32
    %c0_i32_1 = arith.constant 0 : i32
    return %c0_i32, %c0_i32_0 : i32, i32
  }
  func.func @transform_2(%arg0: i32) -> (i32, i32) {
    %c0_i32 = arith.constant 0 : i32
    %c0_i32_0 = arith.constant 0 : i32
    %c0_i32_1 = arith.constant 0 : i32
    return %c0_i32, %c0_i32_0 : i32, i32
  }
  func.func @transform_3(%arg0: i32) -> (i32, i32) {
    %c0_i32 = arith.constant 0 : i32
    %c0_i32_0 = arith.constant 0 : i32
    %c0_i32_1 = arith.constant 0 : i32
    return %c0_i32, %c0_i32_0 : i32, i32
  }
  func.func @transform_4(%arg0: i32) -> (i32, i32) {
    %c0_i32 = arith.constant 0 : i32
    %c0_i32_0 = arith.constant 0 : i32
    %c0_i32_1 = arith.constant 0 : i32
    return %c0_i32, %c0_i32_0 : i32, i32
  }
  func.func @transform_5(%arg0: i32) -> (i32, i32) {
    %c0_i32 = arith.constant 0 : i32
    %c0_i32_0 = arith.constant 0 : i32
    return %arg0, %c0_i32 : i32, i32
  }
}

</mosaic_0001>

<llo_original>
// kernel: tpu_custom_call.1
$region0: #{tpu_custom_call.1}
  #allocation0 [shape = 'u32[]', space=smem, size = 0x4, offset = 0x4, fixed_abs, tag = 'smem constant byte address 0x4 - core index']
  #allocation1 [shape = 'u32[144,128]{1,0:T(1,128)}', space=vmem, size = 0x12000, scoped, tag = 'internal scratch']
  %s0 = inlined_call_operand.hbm [shape: f32[256,128], index: 0, kind: input, shape index: {}]
  %s1 = inlined_call_operand.hbm [shape: bf16[128,256], index: 1, kind: input, shape index: {}]
  %s2 = inlined_call_operand.vmem [shape: f32[1,256], index: 2, kind: input, shape index: {}]
  %s3 = inlined_call_operand.hbm [shape: bf16[256,128], index: 3, kind: input, shape index: {}]
  %s4 = inlined_call_operand.vmem [shape: f32[1,128], index: 4, kind: input, shape index: {}]
  %s5 = inlined_call_operand.hbm [shape: f32[256,128], index: 5, kind: output, shape index: {}]
  %s6 = sld [smem:[#allocation0]]
  $region65: #{tpu_custom_call.1} parent=0
    _
  %s8 = ssub.s32 1, %s6
  %s9 = scalar_select 0, %s8, %s6
  $region1: #{tpu_custom_call.1} parent=0
    #allocation2 [shape = 'u8[131072]{0}', space=vmem, size = 0x20000, scoped, tag = 'input window, operand 0']
    #allocation3 [shape = 's32[2]{0}', space=sflag, size = 0x8, scoped, tag = 'scoped memory for tpu_custom_call.1']
    #allocation4 [shape = 's32[2]{0}', space=sflag, size = 0x8, scoped, tag = 'scoped memory for tpu_custom_call.1']
    #allocation5 [shape = 'u8[65536]{0}', space=vmem, size = 0x10000, scoped, tag = 'input window, operand 1, single buffered']
    #allocation6 [shape = 's32[1]{0}', space=sflag, size = 0x4, scoped, tag = 'scoped memory for tpu_custom_call.1']
    #allocation7 [shape = 'u8[65536]{0}', space=vmem, size = 0x10000, scoped, tag = 'input window, operand 3, single buffered']
    #allocation8 [shape = 'u8[131072]{0}', space=vmem, size = 0x20000, scoped, tag = 'output window, operand 0']
    %10 = vsyncpa [#allocation3], 0
    %s11 = scalar_lea.sflag [#allocation3], 1
    %12 = vsyncpa %s11, 0
    %13 = vsyncpa [#allocation6], 0
    %14 = vsyncpa [#allocation4], 0
    %s15 = scalar_lea.sflag [#allocation4], 1
    %16 = vsyncpa %s15, 0
    loop: start=0, step=1, limit=4
    $region2: #{tpu_custom_call.1} parent=1 // loop_pre_header
      _
    $region3: #{tpu_custom_call.1} parent=1 // loop_header
      %s18 = sphi 0, %s22
      %p19 = scmp.ge.s32.totalorder %s18, 4
      %s28 = sphi 0, %s30
      %s31 = sphi 0, %s28
      %s32 = sphi 0, %s31
      %s48 = sphi 0, %s32
      %s52 = sphi 0, %s52
      %s54 = sphi 0, %s52
      %s55 = sphi 0, %s54
      %s69 = sphi 0, %s55
      %s73 = sphi 0, %s73
      %s75 = sphi 0, %s73
      %s76 = sphi 0, %s75
      %s90 = sphi 0, %s76
      %s94 = sphi 0, %s94
      %s96 = sphi 0, %s94
      %s97 = sphi 0, %s96
      %s111 = sphi 0, %s97
      %s115 = sphi 0, %s115
      %s117 = sphi 0, %s115
      %s118 = sphi 0, %s117
      %s132 = sphi 0, %s118
      %s138 = sphi 0, %s140
      %s141 = sphi 0, %s138
      %s142 = sphi 0, %s141
      %s158 = sphi 0, %s142
    $region4: #{tpu_custom_call.1} parent=1 // loop_header_branch
      %21 = sbr.rel (%p19) target = $region8
    $region5: #{tpu_custom_call.1} parent=1 // loop_body
      %s23 = ssub.s32 %s18, 1
      %s24 = ssub.s32 %s18, 2
      %s25 = sadd.s32 %s18, 1
      %s26 = ssub.s32 %s18, %s25
      %p27 = scmp.eq.s32.totalorder %s26, 0
      %s29 = sadd.s32 %s28, 1
      %s30 = scalar_select %p27, %s28, %s29
      %p33 = pneg %p27
      %p34 = scmp.eq.s32.totalorder %s18, 1
      %p35 = por %p33, %p34
      %p36 = scmp.ne.s32.totalorder %s28, %s31
      %p37 = scmp.eq.s32.totalorder %s18, 0
      %p38 = por %p36, %p37
      %p39 = scmp.ne.s32.totalorder %s28, %s31
      %p40 = scmp.eq.s32.totalorder %s23, 1
      %p41 = por %p39, %p40
      %p42 = scmp.ne.s32.totalorder %s31, %s32
      %p43 = scmp.eq.s32.totalorder %s23, 0
      %p44 = por %p42, %p43
      %p45 = scmp.ne.s32.totalorder %s31, %s32
      %p46 = scmp.eq.s32.totalorder %s24, 1
      %p47 = por %p45, %p46
      %p49 = scmp.ne.s32.totalorder %s32, %s48
      %p50 = scmp.eq.s32.totalorder %s24, 0
      %p51 = por %p49, %p50
      %s53 = sadd.s32 %s52, 1
      %p56 = scmp.eq.s32.totalorder %s18, 1
      %p57 = scmp.ne.s32.totalorder %s52, %s54
      %p58 = scmp.eq.s32.totalorder %s18, 0
      %p59 = por %p57, %p58
      %p60 = scmp.ne.s32.totalorder %s52, %s54
      %p61 = scmp.eq.s32.totalorder %s23, 1
      %p62 = por %p60, %p61
      %p63 = scmp.ne.s32.totalorder %s54, %s55
      %p64 = scmp.eq.s32.totalorder %s23, 0
      %p65 = por %p63, %p64
      %p66 = scmp.ne.s32.totalorder %s54, %s55
      %p67 = scmp.eq.s32.totalorder %s24, 1
      %p68 = por %p66, %p67
      %p70 = scmp.ne.s32.totalorder %s55, %s69
      %p71 = scmp.eq.s32.totalorder %s24, 0
      %p72 = por %p70, %p71
      %s74 = sadd.s32 %s73, 1
      %p77 = scmp.eq.s32.totalorder %s18, 1
      %p78 = scmp.ne.s32.totalorder %s73, %s75
      %p79 = scmp.eq.s32.totalorder %s18, 0
      %p80 = por %p78, %p79
      %p81 = scmp.ne.s32.totalorder %s73, %s75
      %p82 = scmp.eq.s32.totalorder %s23, 1
      %p83 = por %p81, %p82
      %p84 = scmp.ne.s32.totalorder %s75, %s76
      %p85 = scmp.eq.s32.totalorder %s23, 0
      %p86 = por %p84, %p85
      %p87 = scmp.ne.s32.totalorder %s75, %s76
      %p88 = scmp.eq.s32.totalorder %s24, 1
      %p89 = por %p87, %p88
      %p91 = scmp.ne.s32.totalorder %s76, %s90
      %p92 = scmp.eq.s32.totalorder %s24, 0
      %p93 = por %p91, %p92
      %s95 = sadd.s32 %s94, 1
      %p98 = scmp.eq.s32.totalorder %s18, 1
      %p99 = scmp.ne.s32.totalorder %s94, %s96
      %p100 = scmp.eq.s32.totalorder %s18, 0
      %p101 = por %p99, %p100
      %p102 = scmp.ne.s32.totalorder %s94, %s96
      %p103 = scmp.eq.s32.totalorder %s23, 1
      %p104 = por %p102, %p103
      %p105 = scmp.ne.s32.totalorder %s96, %s97
      %p106 = scmp.eq.s32.totalorder %s23, 0
      %p107 = por %p105, %p106
      %p108 = scmp.ne.s32.totalorder %s96, %s97
      %p109 = scmp.eq.s32.totalorder %s24, 1
      %p110 = por %p108, %p109
      %p112 = scmp.ne.s32.totalorder %s97, %s111
      %p113 = scmp.eq.s32.totalorder %s24, 0
      %p114 = por %p112, %p113
      %s116 = sadd.s32 %s115, 1
      %p119 = scmp.eq.s32.totalorder %s18, 1
      %p120 = scmp.ne.s32.totalorder %s115, %s117
      %p121 = scmp.eq.s32.totalorder %s18, 0
      %p122 = por %p120, %p121
      %p123 = scmp.ne.s32.totalorder %s115, %s117
      %p124 = scmp.eq.s32.totalorder %s23, 1
      %p125 = por %p123, %p124
      %p126 = scmp.ne.s32.totalorder %s117, %s118
      %p127 = scmp.eq.s32.totalorder %s23, 0
      %p128 = por %p126, %p127
      %p129 = scmp.ne.s32.totalorder %s117, %s118
      %p130 = scmp.eq.s32.totalorder %s24, 1
      %p131 = por %p129, %p130
      %p133 = scmp.ne.s32.totalorder %s118, %s132
      %p134 = scmp.eq.s32.totalorder %s24, 0
      %p135 = por %p133, %p134
      %s136 = ssub.s32 %s18, %s25
      %p137 = scmp.eq.s32.totalorder %s136, 0
      %s139 = sadd.s32 %s138, 1
      %s140 = scalar_select %p137, %s138, %s139
      %p143 = pneg %p137
      %p144 = scmp.eq.s32.totalorder %s18, 1
      %p145 = por %p143, %p144
      %p146 = scmp.ne.s32.totalorder %s138, %s141
      %p147 = scmp.eq.s32.totalorder %s18, 0
      %p148 = por %p146, %p147
      %p149 = scmp.ne.s32.totalorder %s138, %s141
      %p150 = scmp.eq.s32.totalorder %s23, 1
      %p151 = por %p149, %p150
      %p152 = scmp.ne.s32.totalorder %s141, %s142
      %p153 = scmp.eq.s32.totalorder %s23, 0
      %p154 = por %p152, %p153
      %p155 = scmp.ne.s32.totalorder %s141, %s142
      %p156 = scmp.eq.s32.totalorder %s24, 1
      %p157 = por %p155, %p156
      %p159 = scmp.ne.s32.totalorder %s142, %s158
      %p160 = scmp.eq.s32.totalorder %s24, 0
      %p161 = por %p159, %p160
      %p162 = scmp.le.s32.totalorder 1, %s18
      %p163 = scmp.lt.s32.totalorder %s18, 3
      %p164 = pnand %p162, %p163
      %p165 = pneg %p164
      // Predicated region
      $region9: #{tpu_custom_call.1} parent=5 // pred_check
        _
      $region10: #{tpu_custom_call.1} parent=5 // pred_check_branch
        %167 = sbr.rel (%p164) target = $region12
      $region11: #{tpu_custom_call.1} parent=5 // pred_region
        %s168 = ssub.s32 %s18, 1
        // Predicated region
        $region13: #{tpu_custom_call.1} parent=11 // pred_check
          %p169 = pneg %p65
        $region14: #{tpu_custom_call.1} parent=11 // pred_check_branch
          %171 = sbr.rel (%p169) target = $region16
        $region15: #{tpu_custom_call.1} parent=11 // pred_region
          %s173 = ssub.s32 2048, 2048
          %174 = vsyncadd [#allocation6], %s173
          %s175 = sshll.u32 [#allocation5], 4
          %s176 = int_to_ptr.vmem [resolvable:$true] %s175
          %181 = dma.hbm_to_vmem [thread:$0]  %s1, 2048, %s176, [#allocation6], 128, 128, 8
        $region16: #{tpu_custom_call.1} parent=11 // pred_fallthru
          _
        // Predicated region
        $region17: #{tpu_custom_call.1} parent=11 // pred_check
          %p182 = pneg %p86
        $region18: #{tpu_custom_call.1} parent=11 // pred_check_branch
          %184 = sbr.rel (%p182) target = $region20
        $region19: #{tpu_custom_call.1} parent=11 // pred_region
          _
        $region20: #{tpu_custom_call.1} parent=11 // pred_fallthru
          _
        // Predicated region
        $region21: #{tpu_custom_call.1} parent=11 // pred_check
          %p185 = pneg %p107
        $region22: #{tpu_custom_call.1} parent=11 // pred_check_branch
          %187 = sbr.rel (%p185) target = $region24
        $region23: #{tpu_custom_call.1} parent=11 // pred_region
          %s189 = ssub.s32 2048, 2048
          %190 = vsyncadd [#allocation6], %s189
          %s191 = sshll.u32 [#allocation7], 4
          %s192 = int_to_ptr.vmem [resolvable:$true] %s191
          %197 = dma.hbm_to_vmem [thread:$0]  %s3, 2048, %s192, [#allocation6], 64, 64, 4
        $region24: #{tpu_custom_call.1} parent=11 // pred_fallthru
          _
        // Predicated region
        $region25: #{tpu_custom_call.1} parent=11 // pred_check
          %p198 = pneg %p128
        $region26: #{tpu_custom_call.1} parent=11 // pred_check_branch
          %200 = sbr.rel (%p198) target = $region28
        $region27: #{tpu_custom_call.1} parent=11 // pred_region
          _
        $region28: #{tpu_custom_call.1} parent=11 // pred_fallthru
          _
      $region12: #{tpu_custom_call.1} parent=5 // pred_fallthru
        _
      %p201 = scmp.lt.s32.totalorder %s18, 2
      // Predicated region
      $region29: #{tpu_custom_call.1} parent=5 // pred_check
        %p202 = pneg %p201
      $region30: #{tpu_custom_call.1} parent=5 // pred_check_branch
        %204 = sbr.rel (%p202) target = $region32
      $region31: #{tpu_custom_call.1} parent=5 // pred_region
        // Predicated region
        $region33: #{tpu_custom_call.1} parent=31 // pred_check
          %p205 = pneg %p38
        $region34: #{tpu_custom_call.1} parent=31 // pred_check_branch
          %207 = sbr.rel (%p205) target = $region36
        $region35: #{tpu_custom_call.1} parent=31 // pred_region
          %s208 = sand.u32 %s28, 1
          %s209 = scalar_lea.sflag [#allocation3], %s208
          %s210 = sand.u32 %s28, 1
          %s211 = smul.addr %s210, 128
          %s212 = scalar_lea.vmem [#allocation2], %s211
          %s213 = smul.u32 16, %s18
          %s215 = ssub.s32 2048, 2048
          %216 = vsyncadd %s209, %s215
          %s217 = smul.addr %s213, 128
          %s218 = scalar_lea.hbm %s0, %s217
          %s219 = sshll.u32 %s212, 4
          %s220 = int_to_ptr.vmem [resolvable:$true] %s219
          %225 = dma.hbm_to_vmem [thread:$0]  %s218, 2048, %s220, %s209, 128, 128, 8
        $region36: #{tpu_custom_call.1} parent=31 // pred_fallthru
          _
      $region32: #{tpu_custom_call.1} parent=5 // pred_fallthru
        _
      %p226 = scmp.le.s32.totalorder 1, %s18
      %p227 = scmp.lt.s32.totalorder %s18, 3
      %p228 = pnand %p226, %p227
      %p229 = pneg %p228
      // Predicated region
      $region37: #{tpu_custom_call.1} parent=5 // pred_check
        _
      $region38: #{tpu_custom_call.1} parent=5 // pred_check_branch
        %231 = sbr.rel (%p228) target = $region40
      $region39: #{tpu_custom_call.1} parent=5 // pred_region
        %s232 = ssub.s32 %s18, 1
        %s233 = sand.u32 %s31, 1
        %s234 = scalar_lea.sflag [#allocation3], %s233
        %s235 = sand.u32 %s31, 1
        %s236 = smul.addr %s235, 128
        %s237 = scalar_lea.vmem [#allocation2], %s236
        // Predicated region
        $region41: #{tpu_custom_call.1} parent=39 // pred_check
          %p238 = pneg %p44
        $region42: #{tpu_custom_call.1} parent=39 // pred_check_branch
          %240 = sbr.rel (%p238) target = $region44
        $region43: #{tpu_custom_call.1} parent=39 // pred_region
          %241 = dma.done %s234, 2048
        $region44: #{tpu_custom_call.1} parent=39 // pred_fallthru
          _
        // Predicated region
        $region45: #{tpu_custom_call.1} parent=39 // pred_check
          %p242 = pneg %p65
        $region46: #{tpu_custom_call.1} parent=39 // pred_check_branch
          %244 = sbr.rel (%p242) target = $region48
        $region47: #{tpu_custom_call.1} parent=39 // pred_region
          %245 = dma.done [#allocation6], 2048
        $region48: #{tpu_custom_call.1} parent=39 // pred_fallthru
          _
        // Predicated region
        $region49: #{tpu_custom_call.1} parent=39 // pred_check
          %p246 = pneg %p107
        $region50: #{tpu_custom_call.1} parent=39 // pred_check_branch
          %248 = sbr.rel (%p246) target = $region52
        $region51: #{tpu_custom_call.1} parent=39 // pred_region
          %249 = dma.done [#allocation6], 2048
        $region52: #{tpu_custom_call.1} parent=39 // pred_fallthru
          _
        %s250 = sand.u32 %s31, 1
        %s251 = scalar_lea.sflag [#allocation3], %s250
        %s252 = sand.u32 %s31, 1
        %s253 = smul.addr %s252, 128
        %s254 = scalar_lea.vmem [#allocation2], %s253
        %p255 = pneg %p44
        %p256 = pneg %p41
        %p257 = pneg %p65
        %p258 = pneg %p62
        %p259 = pneg %p86
        %p260 = pneg %p83
        %p261 = pneg %p107
        %p262 = pneg %p104
        %p263 = pneg %p128
        %p264 = pneg %p125
        %p265 = pneg %p154
        %p266 = pneg %p151
        %s267 = sand.u32 %s141, 1
        %s268 = scalar_lea.sflag [#allocation4], %s267
        %s269 = sand.u32 %s141, 1
        %s270 = smul.addr %s269, 128
        %s271 = scalar_lea.vmem [#allocation8], %s270
        %s272 = smul.u32 16, %s23
        %s273 = smul.u32 16, %s23
        %v275 = vld [vmem:[%s237] sm:$0xff]
        %v276 = vld [vmem:[%s237 + $0x8] sm:$0xff]
        %v277 = vld [vmem:[%s237 + $0x10] sm:$0xff]
        %v278 = vld [vmem:[%s237 + $0x18] sm:$0xff]
        %v279 = vld [vmem:[%s237 + $0x20] sm:$0xff]
        %v280 = vld [vmem:[%s237 + $0x28] sm:$0xff]
        %v281 = vld [vmem:[%s237 + $0x30] sm:$0xff]
        %v282 = vld [vmem:[%s237 + $0x38] sm:$0xff]
        %v283 = vld [vmem:[%s237 + $0x40] sm:$0xff]
        %v284 = vld [vmem:[%s237 + $0x48] sm:$0xff]
        %v285 = vld [vmem:[%s237 + $0x50] sm:$0xff]
        %v286 = vld [vmem:[%s237 + $0x58] sm:$0xff]
        %v287 = vld [vmem:[%s237 + $0x60] sm:$0xff]
        %v288 = vld [vmem:[%s237 + $0x68] sm:$0xff]
        %v289 = vld [vmem:[%s237 + $0x70] sm:$0xff]
        %v290 = vld [vmem:[%s237 + $0x78] sm:$0xff]
        %v291 = vpack.c.bf16 %v276, %v275
        %v292 = vpack.c.bf16 %v278, %v277
        %v293 = vpack.c.bf16 %v280, %v279
        %v294 = vpack.c.bf16 %v282, %v281
        %v295 = vpack.c.bf16 %v284, %v283
        %v296 = vpack.c.bf16 %v286, %v285
        %v297 = vpack.c.bf16 %v288, %v287
        %v298 = vpack.c.bf16 %v290, %v289
        %v299 = vld [vmem:[#allocation5] sm:$0xff]
        %v300 = vld [vmem:[#allocation5 + $0x8] sm:$0xff]
        %v301 = vld [vmem:[#allocation5 + $0x10] sm:$0xff]
        %v302 = vld [vmem:[#allocation5 + $0x18] sm:$0xff]
        %v303 = vld [vmem:[#allocation5 + $0x20] sm:$0xff]
        %v304 = vld [vmem:[#allocation5 + $0x28] sm:$0xff]
        %v305 = vld [vmem:[#allocation5 + $0x30] sm:$0xff]
        %v306 = vld [vmem:[#allocation5 + $0x38] sm:$0xff]
        %v307 = vld [vmem:[#allocation5 + $0x40] sm:$0xff]
        %v308 = vld [vmem:[#allocation5 + $0x48] sm:$0xff]
        %v309 = vld [vmem:[#allocation5 + $0x50] sm:$0xff]
        %v310 = vld [vmem:[#allocation5 + $0x58] sm:$0xff]
        %v311 = vld [vmem:[#allocation5 + $0x60] sm:$0xff]
        %v312 = vld [vmem:[#allocation5 + $0x68] sm:$0xff]
        %v313 = vld [vmem:[#allocation5 + $0x70] sm:$0xff]
        %v314 = vld [vmem:[#allocation5 + $0x78] sm:$0xff]
        %v315 = vld [vmem:[%s2] sm:$0x3]
        %v317 = vlaneseq
        %v318 = vshrl.u32 %v317, 7
        %v319 = vsub.s32 0, %v318
        %v320 = vrot.slane %v315, %v319
        %v321 = vlaneseq
        %v322 = vshrl.u32 %v321, 7
        %v323 = vsub.s32 1, %v322
        %v324 = vrot.slane %v315, %v323
        %v343 = vunpack.c.l.b16 %v299
        %v344 = vunpack.c.h.b16 %v299
        %v345 = vunpack.c.l.b16 %v300
        %v346 = vunpack.c.h.b16 %v300
        %v347 = vunpack.c.l.b16 %v301
        %v348 = vunpack.c.h.b16 %v301
        %v349 = vunpack.c.l.b16 %v302
        %v350 = vunpack.c.h.b16 %v302
        %v351 = vunpack.c.l.b16 %v303
        %v352 = vunpack.c.h.b16 %v303
        %v353 = vunpack.c.l.b16 %v304
        %v354 = vunpack.c.h.b16 %v304
        %v355 = vunpack.c.l.b16 %v305
        %v356 = vunpack.c.h.b16 %v305
        %v357 = vunpack.c.l.b16 %v306
        %v358 = vunpack.c.h.b16 %v306
        %v359 = vunpack.c.l.b16 %v307
        %v360 = vunpack.c.h.b16 %v307
        %v361 = vunpack.c.l.b16 %v308
        %v362 = vunpack.c.h.b16 %v308
        %v363 = vunpack.c.l.b16 %v309
        %v364 = vunpack.c.h.b16 %v309
        %v365 = vunpack.c.l.b16 %v310
        %v366 = vunpack.c.h.b16 %v310
        %v367 = vunpack.c.l.b16 %v311
        %v368 = vunpack.c.h.b16 %v311
        %v369 = vunpack.c.l.b16 %v312
        %v370 = vunpack.c.h.b16 %v312
        %v371 = vunpack.c.l.b16 %v313
        %v372 = vunpack.c.h.b16 %v313
        %v373 = vunpack.c.l.b16 %v314
        %v374 = vunpack.c.h.b16 %v314
        %v375 = vpack.c.b16 %v345, %v343
        %v376 = vpack.c.b16 %v346, %v344
        %v377 = vpack.c.b16 %v349, %v347
        %v378 = vpack.c.b16 %v350, %v348
        %v379 = vpack.c.b16 %v353, %v351
        %v380 = vpack.c.b16 %v354, %v352
        %v381 = vpack.c.b16 %v357, %v355
        %v382 = vpack.c.b16 %v358, %v356
        %v383 = vpack.c.b16 %v361, %v359
        %v384 = vpack.c.b16 %v362, %v360
        %v385 = vpack.c.b16 %v365, %v363
        %v386 = vpack.c.b16 %v366, %v364
        %v387 = vpack.c.b16 %v369, %v367
        %v388 = vpack.c.b16 %v370, %v368
        %v389 = vpack.c.b16 %v373, %v371
        %v390 = vpack.c.b16 %v374, %v372
        %407 = vmatprep.subr.bf16.mxu0 %v376
        %408 = vmatpush1.bf16.msra.mxu0 %v375
        %409 = vmatprep.subr.bf16.mxu0 %v378
        %410 = vmatpush1.bf16.msra.mxu0 %v377
        %411 = vmatprep.subr.bf16.mxu0 %v380
        %412 = vmatpush1.bf16.msra.mxu0 %v379
        %413 = vmatprep.subr.bf16.mxu0 %v382
        %414 = vmatpush1.bf16.msra.mxu0 %v381
        %415 = vmatprep.subr.bf16.mxu0 %v384
        %416 = vmatpush1.bf16.msra.mxu0 %v383
        %417 = vmatprep.subr.bf16.mxu0 %v386
        %418 = vmatpush1.bf16.msra.mxu0 %v385
        %419 = vmatprep.subr.bf16.mxu0 %v388
        %420 = vmatpush1.bf16.msra.mxu0 %v387
        %421 = vmatprep.subr.bf16.mxu0 %v390
        %422 = vmatpush1.bf16.msra.mxu0 %v389
        %423 = vmatprep.subr.bf16.mxu0 0
        %424 = vmatpush1.bf16.msra.mxu0 0
        %425 = vmatprep.subr.bf16.mxu0 0
        %426 = vmatpush1.bf16.msra.mxu0 0
        %427 = vmatprep.subr.bf16.mxu0 0
        %428 = vmatpush1.bf16.msra.mxu0 0
        %429 = vmatprep.subr.bf16.mxu0 0
        %430 = vmatpush1.bf16.msra.mxu0 0
        %431 = vmatprep.subr.bf16.mxu0 0
        %432 = vmatpush1.bf16.msra.mxu0 0
        %433 = vmatprep.subr.bf16.mxu0 0
        %434 = vmatpush1.bf16.msra.mxu0 0
        %435 = vmatprep.subr.bf16.mxu0 0
        %436 = vmatpush1.bf16.msra.mxu0 0
        %437 = vmatprep.subr.bf16.mxu0 0
        %438 = vmatpush1.bf16.msra.mxu0 0
        %439 = vmatprep.mubr.bf16.mxu0 0
        %440 = vmatmul.mubr.bf16.gmra.mrb[0].mxu0 %v291
        %v441 = vpop.f32.mrb[0].mxu0
        %v442 = vadd.f32 %v320, %v441
        %v443 = vpop.f32.mrb[0].mxu0
        %v444 = vadd.f32 %v324, %v443
        %v445 = vpop.f32.mrb[0].mxu0
        %v446 = vadd.f32 %v320, %v445
        %v447 = vpop.f32.mrb[0].mxu0
        %v448 = vadd.f32 %v324, %v447
        %449 = vmatprep.mubr.bf16.mxu0 0
        %450 = vmatmul.mubr.bf16.gmra.mrb[0].mxu0 %v292
        %v451 = vpop.f32.mrb[0].mxu0
        %v452 = vadd.f32 %v320, %v451
        %v453 = vpop.f32.mrb[0].mxu0
        %v454 = vadd.f32 %v324, %v453
        %v455 = vpop.f32.mrb[0].mxu0
        %v456 = vadd.f32 %v320, %v455
        %v457 = vpop.f32.mrb[0].mxu0
        %v458 = vadd.f32 %v324, %v457
        %459 = vmatprep.mubr.bf16.mxu0 0
        %460 = vmatmul.mubr.bf16.gmra.mrb[0].mxu0 %v293
        %v461 = vpop.f32.mrb[0].mxu0
        %v462 = vadd.f32 %v320, %v461
        %v463 = vpop.f32.mrb[0].mxu0
        %v464 = vadd.f32 %v324, %v463
        %v465 = vpop.f32.mrb[0].mxu0
        %v466 = vadd.f32 %v320, %v465
        %v467 = vpop.f32.mrb[0].mxu0
        %v468 = vadd.f32 %v324, %v467
        %469 = vmatprep.mubr.bf16.mxu0 0
        %470 = vmatmul.mubr.bf16.gmra.mrb[0].mxu0 %v294
        %v471 = vpop.f32.mrb[0].mxu0
        %v472 = vadd.f32 %v320, %v471
        %v473 = vpop.f32.mrb[0].mxu0
        %v474 = vadd.f32 %v324, %v473
        %v475 = vpop.f32.mrb[0].mxu0
        %v476 = vadd.f32 %v320, %v475
        %v477 = vpop.f32.mrb[0].mxu0
        %v478 = vadd.f32 %v324, %v477
        %479 = vmatprep.mubr.bf16.mxu0 0
        %480 = vmatmul.mubr.bf16.gmra.mrb[0].mxu0 %v295
        %v481 = vpop.f32.mrb[0].mxu0
        %v482 = vadd.f32 %v320, %v481
        %v483 = vpop.f32.mrb[0].mxu0
        %v484 = vadd.f32 %v324, %v483
        %v485 = vpop.f32.mrb[0].mxu0
        %v486 = vadd.f32 %v320, %v485
        %v487 = vpop.f32.mrb[0].mxu0
        %v488 = vadd.f32 %v324, %v487
        %489 = vmatprep.mubr.bf16.mxu0 0
        %490 = vmatmul.mubr.bf16.gmra.mrb[0].mxu0 %v296
        %v491 = vpop.f32.mrb[0].mxu0
        %v492 = vadd.f32 %v320, %v491
        %v493 = vpop.f32.mrb[0].mxu0
        %v494 = vadd.f32 %v324, %v493
        %v495 = vpop.f32.mrb[0].mxu0
        %v496 = vadd.f32 %v320, %v495
        %v497 = vpop.f32.mrb[0].mxu0
        %v498 = vadd.f32 %v324, %v497
        %499 = vmatprep.mubr.bf16.mxu0 0
        %500 = vmatmul.mubr.bf16.gmra.mrb[0].mxu0 %v297
        %v501 = vpop.f32.mrb[0].mxu0
        %v502 = vadd.f32 %v320, %v501
        %v503 = vpop.f32.mrb[0].mxu0
        %v504 = vadd.f32 %v324, %v503
        %v505 = vpop.f32.mrb[0].mxu0
        %v506 = vadd.f32 %v320, %v505
        %v507 = vpop.f32.mrb[0].mxu0
        %v508 = vadd.f32 %v324, %v507
        %509 = vmatprep.mubr.bf16.mxu0 0
        %510 = vmatmul.mubr.bf16.gmra.mrb[0].mxu0 %v298
        %v511 = vpop.f32.mrb[0].mxu0
        %v512 = vadd.f32 %v320, %v511
        %v513 = vpop.f32.mrb[0].mxu0
        %v514 = vadd.f32 %v324, %v513
        %v515 = vpop.f32.mrb[0].mxu0
        %v516 = vadd.f32 %v320, %v515
        %v517 = vpop.f32.mrb[0].mxu0
        %v518 = vadd.f32 %v324, %v517
        %519 = vdwg.mxu0
        %v520 = vmax.f32 %v442, 0.0
        %v521 = vmax.f32 %v444, 0.0
        %v522 = vmax.f32 %v446, 0.0
        %v523 = vmax.f32 %v448, 0.0
        %v524 = vmax.f32 %v452, 0.0
        %v525 = vmax.f32 %v454, 0.0
        %v526 = vmax.f32 %v456, 0.0
        %v527 = vmax.f32 %v458, 0.0
        %v528 = vmax.f32 %v462, 0.0
        %v529 = vmax.f32 %v464, 0.0
        %v530 = vmax.f32 %v466, 0.0
        %v531 = vmax.f32 %v468, 0.0
        %v532 = vmax.f32 %v472, 0.0
        %v533 = vmax.f32 %v474, 0.0
        %v534 = vmax.f32 %v476, 0.0
        %v535 = vmax.f32 %v478, 0.0
        %v536 = vmax.f32 %v482, 0.0
        %v537 = vmax.f32 %v484, 0.0
        %v538 = vmax.f32 %v486, 0.0
        %v539 = vmax.f32 %v488, 0.0
        %v540 = vmax.f32 %v492, 0.0
        %v541 = vmax.f32 %v494, 0.0
        %v542 = vmax.f32 %v496, 0.0
        %v543 = vmax.f32 %v498, 0.0
        %v544 = vmax.f32 %v502, 0.0
        %v545 = vmax.f32 %v504, 0.0
        %v546 = vmax.f32 %v506, 0.0
        %v547 = vmax.f32 %v508, 0.0
        %v548 = vmax.f32 %v512, 0.0
        %v549 = vmax.f32 %v514, 0.0
        %v550 = vmax.f32 %v516, 0.0
        %v551 = vmax.f32 %v518, 0.0
        %v552 = vpack.c.bf16 %v522, %v520
        %v553 = vpack.c.bf16 %v523, %v521
        %v554 = vpack.c.bf16 %v526, %v524
        %v555 = vpack.c.bf16 %v527, %v525
        %v556 = vpack.c.bf16 %v530, %v528
        %v557 = vpack.c.bf16 %v531, %v529
        %v558 = vpack.c.bf16 %v534, %v532
        %v559 = vpack.c.bf16 %v535, %v533
        %v560 = vpack.c.bf16 %v538, %v536
        %v561 = vpack.c.bf16 %v539, %v537
        %v562 = vpack.c.bf16 %v542, %v540
        %v563 = vpack.c.bf16 %v543, %v541
        %v564 = vpack.c.bf16 %v546, %v544
        %v565 = vpack.c.bf16 %v547, %v545
        %v566 = vpack.c.bf16 %v550, %v548
        %v567 = vpack.c.bf16 %v551, %v549
        %v568 = vld [vmem:[#allocation7] sm:$0xf]
        %v569 = vld [vmem:[#allocation7 + $0x4] sm:$0xf]
        %v570 = vld [vmem:[#allocation7 + $0x8] sm:$0xf]
        %v571 = vld [vmem:[#allocation7 + $0xc] sm:$0xf]
        %v572 = vld [vmem:[#allocation7 + $0x10] sm:$0xf]
        %v573 = vld [vmem:[#allocation7 + $0x14] sm:$0xf]
        %v574 = vld [vmem:[#allocation7 + $0x18] sm:$0xf]
        %v575 = vld [vmem:[#allocation7 + $0x1c] sm:$0xf]
        %v576 = vld [vmem:[#allocation7 + $0x20] sm:$0xf]
        %v577 = vld [vmem:[#allocation7 + $0x24] sm:$0xf]
        %v578 = vld [vmem:[#allocation7 + $0x28] sm:$0xf]
        %v579 = vld [vmem:[#allocation7 + $0x2c] sm:$0xf]
        %v580 = vld [vmem:[#allocation7 + $0x30] sm:$0xf]
        %v581 = vld [vmem:[#allocation7 + $0x34] sm:$0xf]
        %v582 = vld [vmem:[#allocation7 + $0x38] sm:$0xf]
        %v583 = vld [vmem:[#allocation7 + $0x3c] sm:$0xf]
        %v584 = vld [vmem:[#allocation7 + $0x40] sm:$0xf]
        %v585 = vld [vmem:[#allocation7 + $0x44] sm:$0xf]
        %v586 = vld [vmem:[#allocation7 + $0x48] sm:$0xf]
        %v587 = vld [vmem:[#allocation7 + $0x4c] sm:$0xf]
        %v588 = vld [vmem:[#allocation7 + $0x50] sm:$0xf]
        %v589 = vld [vmem:[#allocation7 + $0x54] sm:$0xf]
        %v590 = vld [vmem:[#allocation7 + $0x58] sm:$0xf]
        %v591 = vld [vmem:[#allocation7 + $0x5c] sm:$0xf]
        %v592 = vld [vmem:[#allocation7 + $0x60] sm:$0xf]
        %v593 = vld [vmem:[#allocation7 + $0x64] sm:$0xf]
        %v594 = vld [vmem:[#allocation7 + $0x68] sm:$0xf]
        %v595 = vld [vmem:[#allocation7 + $0x6c] sm:$0xf]
        %v596 = vld [vmem:[#allocation7 + $0x70] sm:$0xf]
        %v597 = vld [vmem:[#allocation7 + $0x74] sm:$0xf]
        %v598 = vld [vmem:[#allocation7 + $0x78] sm:$0xf]
        %v599 = vld [vmem:[#allocation7 + $0x7c] sm:$0xf]
        %v600 = vld [vmem:[%s4] sm:$0x1]
        %v602 = vlaneseq
        %v603 = vshrl.u32 %v602, 7
        %v604 = vsub.s32 0, %v603
        %v605 = vrot.slane %v600, %v604
        %v639 = vunpack.c.l.b16 %v568
        %v640 = vunpack.c.l.b16 %v569
        %v641 = vunpack.c.l.b16 %v570
        %v642 = vunpack.c.l.b16 %v571
        %v643 = vunpack.c.l.b16 %v572
        %v644 = vunpack.c.l.b16 %v573
        %v645 = vunpack.c.l.b16 %v574
        %v646 = vunpack.c.l.b16 %v575
        %v647 = vunpack.c.l.b16 %v576
        %v648 = vunpack.c.l.b16 %v577
        %v649 = vunpack.c.l.b16 %v578
        %v650 = vunpack.c.l.b16 %v579
        %v651 = vunpack.c.l.b16 %v580
        %v652 = vunpack.c.l.b16 %v581
        %v653 = vunpack.c.l.b16 %v582
        %v654 = vunpack.c.l.b16 %v583
        %v655 = vunpack.c.l.b16 %v584
        %v656 = vunpack.c.l.b16 %v585
        %v657 = vunpack.c.l.b16 %v586
        %v658 = vunpack.c.l.b16 %v587
        %v659 = vunpack.c.l.b16 %v588
        %v660 = vunpack.c.l.b16 %v589
        %v661 = vunpack.c.l.b16 %v590
        %v662 = vunpack.c.l.b16 %v591
        %v663 = vunpack.c.l.b16 %v592
        %v664 = vunpack.c.l.b16 %v593
        %v665 = vunpack.c.l.b16 %v594
        %v666 = vunpack.c.l.b16 %v595
        %v667 = vunpack.c.l.b16 %v596
        %v668 = vunpack.c.l.b16 %v597
        %v669 = vunpack.c.l.b16 %v598
        %v670 = vunpack.c.l.b16 %v599
        %v671 = vpack.c.b16 %v640, %v639
        %v672 = vpack.c.b16 %v642, %v641
        %v673 = vpack.c.b16 %v644, %v643
        %v674 = vpack.c.b16 %v646, %v645
        %v675 = vpack.c.b16 %v648, %v647
        %v676 = vpack.c.b16 %v650, %v649
        %v677 = vpack.c.b16 %v652, %v651
        %v678 = vpack.c.b16 %v654, %v653
        %v679 = vpack.c.b16 %v656, %v655
        %v680 = vpack.c.b16 %v658, %v657
        %v681 = vpack.c.b16 %v660, %v659
        %v682 = vpack.c.b16 %v662, %v661
        %v683 = vpack.c.b16 %v664, %v663
        %v684 = vpack.c.b16 %v666, %v665
        %v685 = vpack.c.b16 %v668, %v667
        %v686 = vpack.c.b16 %v670, %v669
        %703 = vmatprep.subr.bf16.mxu0 0
        %704 = vmatpush1.bf16.msra.mxu0 %v671
        %705 = vmatprep.subr.bf16.mxu0 0
        %706 = vmatpush1.bf16.msra.mxu0 %v672
        %707 = vmatprep.subr.bf16.mxu0 0
        %708 = vmatpush1.bf16.msra.mxu0 %v673
        %709 = vmatprep.subr.bf16.mxu0 0
        %710 = vmatpush1.bf16.msra.mxu0 %v674
        %711 = vmatprep.subr.bf16.mxu0 0
        %712 = vmatpush1.bf16.msra.mxu0 %v675
        %713 = vmatprep.subr.bf16.mxu0 0
        %714 = vmatpush1.bf16.msra.mxu0 %v676
        %715 = vmatprep.subr.bf16.mxu0 0
        %716 = vmatpush1.bf16.msra.mxu0 %v677
        %717 = vmatprep.subr.bf16.mxu0 0
        %718 = vmatpush1.bf16.msra.mxu0 %v678
        %719 = vmatprep.subr.bf16.mxu0 0
        %720 = vmatpush1.bf16.msra.mxu0 %v679
        %721 = vmatprep.subr.bf16.mxu0 0
        %722 = vmatpush1.bf16.msra.mxu0 %v680
        %723 = vmatprep.subr.bf16.mxu0 0
        %724 = vmatpush1.bf16.msra.mxu0 %v681
        %725 = vmatprep.subr.bf16.mxu0 0
        %726 = vmatpush1.bf16.msra.mxu0 %v682
        %727 = vmatprep.subr.bf16.mxu0 0
        %728 = vmatpush1.bf16.msra.mxu0 %v683
        %729 = vmatprep.subr.bf16.mxu0 0
        %730 = vmatpush1.bf16.msra.mxu0 %v684
        %731 = vmatprep.subr.bf16.mxu0 0
        %732 = vmatpush1.bf16.msra.mxu0 %v685
        %733 = vmatprep.subr.bf16.mxu0 0
        %734 = vmatpush1.bf16.msra.mxu0 %v686
        %735 = vmatprep.mubr.bf16.mxu0 %v553
        %736 = vmatmul.mubr.bf16.gmra.mrb[0].mxu0 %v552
        %v737 = vpop.f32.mrb[0].mxu0
        %v738 = vadd.f32 %v605, %v737
        %v739 = vpop.f32.mrb[0].mxu0
        %v740 = vpop.f32.mrb[0].mxu0
        %v741 = vadd.f32 %v605, %v740
        %v742 = vpop.f32.mrb[0].mxu0
        %743 = vmatprep.mubr.bf16.mxu0 %v555
        %744 = vmatmul.mubr.bf16.gmra.mrb[0].mxu0 %v554
        %v745 = vpop.f32.mrb[0].mxu0
        %v746 = vadd.f32 %v605, %v745
        %v747 = vpop.f32.mrb[0].mxu0
        %v748 = vpop.f32.mrb[0].mxu0
        %v749 = vadd.f32 %v605, %v748
        %v750 = vpop.f32.mrb[0].mxu0
        %751 = vmatprep.mubr.bf16.mxu0 %v557
        %752 = vmatmul.mubr.bf16.gmra.mrb[0].mxu0 %v556
        %v753 = vpop.f32.mrb[0].mxu0
        %v754 = vadd.f32 %v605, %v753
        %v755 = vpop.f32.mrb[0].mxu0
        %v756 = vpop.f32.mrb[0].mxu0
        %v757 = vadd.f32 %v605, %v756
        %v758 = vpop.f32.mrb[0].mxu0
        %759 = vmatprep.mubr.bf16.mxu0 %v559
        %760 = vmatmul.mubr.bf16.gmra.mrb[0].mxu0 %v558
        %v761 = vpop.f32.mrb[0].mxu0
        %v762 = vadd.f32 %v605, %v761
        %v763 = vpop.f32.mrb[0].mxu0
        %v764 = vpop.f32.mrb[0].mxu0
        %v765 = vadd.f32 %v605, %v764
        %v766 = vpop.f32.mrb[0].mxu0
        %767 = vmatprep.mubr.bf16.mxu0 %v561
        %768 = vmatmul.mubr.bf16.gmra.mrb[0].mxu0 %v560
        %v769 = vpop.f32.mrb[0].mxu0
        %v770 = vadd.f32 %v605, %v769
        %v771 = vpop.f32.mrb[0].mxu0
        %v772 = vpop.f32.mrb[0].mxu0
        %v773 = vadd.f32 %v605, %v772
        %v774 = vpop.f32.mrb[0].mxu0
        %775 = vmatprep.mubr.bf16.mxu0 %v563
        %776 = vmatmul.mubr.bf16.gmra.mrb[0].mxu0 %v562
        %v777 = vpop.f32.mrb[0].mxu0
        %v778 = vadd.f32 %v605, %v777
        %v779 = vpop.f32.mrb[0].mxu0
        %v780 = vpop.f32.mrb[0].mxu0
        %v781 = vadd.f32 %v605, %v780
        %v782 = vpop.f32.mrb[0].mxu0
        %783 = vmatprep.mubr.bf16.mxu0 %v565
        %784 = vmatmul.mubr.bf16.gmra.mrb[0].mxu0 %v564
        %v785 = vpop.f32.mrb[0].mxu0
        %v786 = vadd.f32 %v605, %v785
        %v787 = vpop.f32.mrb[0].mxu0
        %v788 = vpop.f32.mrb[0].mxu0
        %v789 = vadd.f32 %v605, %v788
        %v790 = vpop.f32.mrb[0].mxu0
        %791 = vmatprep.mubr.bf16.mxu0 %v567
        %792 = vmatmul.mubr.bf16.gmra.mrb[0].mxu0 %v566
        %v793 = vpop.f32.mrb[0].mxu0
        %v794 = vadd.f32 %v605, %v793
        %v795 = vpop.f32.mrb[0].mxu0
        %v796 = vpop.f32.mrb[0].mxu0
        %v797 = vadd.f32 %v605, %v796
        %v798 = vpop.f32.mrb[0].mxu0
        %799 = vdwg.mxu0
        %800 = vst [vmem:[%s271] sm:$0xff] %v738
        %801 = vst [vmem:[%s271 + $0x8] sm:$0xff] %v741
        %802 = vst [vmem:[%s271 + $0x10] sm:$0xff] %v746
        %803 = vst [vmem:[%s271 + $0x18] sm:$0xff] %v749
        %804 = vst [vmem:[%s271 + $0x20] sm:$0xff] %v754
        %805 = vst [vmem:[%s271 + $0x28] sm:$0xff] %v757
        %806 = vst [vmem:[%s271 + $0x30] sm:$0xff] %v762
        %807 = vst [vmem:[%s271 + $0x38] sm:$0xff] %v765
        %808 = vst [vmem:[%s271 + $0x40] sm:$0xff] %v770
        %809 = vst [vmem:[%s271 + $0x48] sm:$0xff] %v773
        %810 = vst [vmem:[%s271 + $0x50] sm:$0xff] %v778
        %811 = vst [vmem:[%s271 + $0x58] sm:$0xff] %v781
        %812 = vst [vmem:[%s271 + $0x60] sm:$0xff] %v786
        %813 = vst [vmem:[%s271 + $0x68] sm:$0xff] %v789
        %814 = vst [vmem:[%s271 + $0x70] sm:$0xff] %v794
        %815 = vst [vmem:[%s271 + $0x78] sm:$0xff] %v797
        %s816 = sand.u32 %s141, 1
        %s817 = scalar_lea.sflag [#allocation4], %s816
        %s818 = sand.u32 %s141, 1
        %s819 = smul.addr %s818, 128
        %s820 = scalar_lea.vmem [#allocation8], %s819
        // Predicated region
        $region53: #{tpu_custom_call.1} parent=39 // pred_check
          %p821 = pneg %p151
        $region54: #{tpu_custom_call.1} parent=39 // pred_check_branch
          %823 = sbr.rel (%p821) target = $region56
        $region55: #{tpu_custom_call.1} parent=39 // pred_region
          %s824 = smul.u32 16, %s23
          %s826 = ssub.s32 2048, 2048
          %827 = vsyncadd %s817, %s826
          %s828 = smul.addr %s824, 128
          %s829 = scalar_lea.hbm %s5, %s828
          %s830 = sshll.u32 %s820, 4
          %s831 = int_to_ptr.vmem [resolvable:$true] %s830
          %836 = dma.vmem_to_hbm [thread:$0]  %s831, 2048, %s829, %s817, 128, 128, 8
        $region56: #{tpu_custom_call.1} parent=39 // pred_fallthru
          _
      $region40: #{tpu_custom_call.1} parent=5 // pred_fallthru
        _
      %p837 = scmp.le.s32.totalorder 2, %s18
      // Predicated region
      $region57: #{tpu_custom_call.1} parent=5 // pred_check
        %p838 = pneg %p837
      $region58: #{tpu_custom_call.1} parent=5 // pred_check_branch
        %840 = sbr.rel (%p838) target = $region60
      $region59: #{tpu_custom_call.1} parent=5 // pred_region
        %s841 = ssub.s32 %s18, 2
        // Predicated region
        $region61: #{tpu_custom_call.1} parent=59 // pred_check
          %p842 = pneg %p157
        $region62: #{tpu_custom_call.1} parent=59 // pred_check_branch
          %844 = sbr.rel (%p842) target = $region64
        $region63: #{tpu_custom_call.1} parent=59 // pred_region
          %s845 = sand.u32 %s142, 1
          %s846 = scalar_lea.sflag [#allocation4], %s845
          %s847 = sand.u32 %s142, 1
          %s848 = smul.addr %s847, 128
          %s849 = scalar_lea.vmem [#allocation8], %s848
          %850 = dma.done %s846, 2048
        $region64: #{tpu_custom_call.1} parent=59 // pred_fallthru
          _
      $region60: #{tpu_custom_call.1} parent=5 // pred_fallthru
        _
    $region6: #{tpu_custom_call.1} parent=1 // loop_footer
      %s22 = sadd.s32 1, %s18
    $region7: #{tpu_custom_call.1} parent=1 // loop_footer_branch
      %17 = sbr.rel target = $region3
    $region8: #{tpu_custom_call.1} parent=1 // loop_exit
      _
    %851 = vsyncpa [#allocation3], 1
    %s852 = scalar_lea.sflag [#allocation3], 1
    %853 = vsyncpa %s852, 1
    %854 = vsyncpa [#allocation6], 1
    %855 = vsyncpa [#allocation4], 1
    %s856 = scalar_lea.sflag [#allocation4], 1
    %857 = vsyncpa %s856, 1

</llo_original>
